<compile_context>
chip_gen: v7x
topology: tpu7x:2x2x1
jax: 0.10.0
libtpu: 0.0.40
codegen_flags: <defaults>
</compile_context>

<pallas_src>
import functools
import math

import jax
import jax.numpy as jnp
from jax import lax
from jax.experimental import pallas as pl
from jax.experimental.pallas import tpu as pltpu

_LANE = 128
_SUBLANE = 8
_MIB = 1024 * 1024


def _round_up(x, m):
    return ((x + m - 1) // m) * m


def _pick_tile(dim, gran, cap):
    """Largest multiple of `gran` that divides `dim` and is <= cap (>= gran)."""
    cap = max(gran, min(cap, dim))
    t = (cap // gran) * gran
    while t > gran and dim % t:
        t -= gran
    return t


# ---------------------------------------------------------------------------
# Kernels
# ---------------------------------------------------------------------------
def _nt_dot(x, w):
    # x: (tm, tk), w: (tn, tk) -> (tm, tn).  Contraction on the last axis of
    # both operands, i.e. x @ w.T without materializing a transpose anywhere.
    return lax.dot_general(
        x, w,
        dimension_numbers=(((1,), (1,)), ((), ())),
        preferred_element_type=jnp.float32,
    )


def _matmul_kernel_resident_k(x_ref, w_ref, o_ref):
    # Fast path: the full contraction dimension is resident in VMEM,
    # one MXU shot per N tile, no accumulator machinery.
    o_ref[...] = _nt_dot(x_ref[...], w_ref[...]).astype(o_ref.dtype)


def _matmul_kernel_tiled_k(x_ref, w_ref, o_ref):
    # General path: K is the innermost ("arbitrary") grid axis.  The f32 output
    # tile's block index (i, j) is constant across K, so it stays VMEM-resident
    # for the whole reduction and we accumulate into it directly.
    @pl.when(pl.program_id(2) == 0)
    def _init():
        o_ref[...] = jnp.zeros_like(o_ref)

    o_ref[...] += _nt_dot(x_ref[...], w_ref[...])


# ---------------------------------------------------------------------------
# Tiling plan
# ---------------------------------------------------------------------------
def _plan(Mp, Kp, Np, vmem_cap):
    budget = min(vmem_cap // 2, 48 * _MIB)          # leave headroom for compiler
    big_vmem = vmem_cap >= 96 * _MIB                # v5e / v6e (128 MiB VMEM)
    tm_cap = 512
    tk_cap = 1024 if big_vmem else 512
    tn_cap = 1024 if big_vmem else 512

    # ---- small-batch fast path: full K resident, grid only over N ----------
    if Mp <= 512 and Kp <= 2048:
        x_bytes = 2 * Mp * Kp * 4                   # x tile (count double-buffer)
        tn_budget = (budget - x_bytes) // (8 * (Kp + Mp))
        tn_budget = (tn_budget // _LANE) * _LANE
        if tn_budget >= _LANE:
            tn = _pick_tile(Np, _LANE, min(tn_cap, tn_budget))
            # v7x megacore: ensure the single parallel axis has >= 2 blocks.
            if not big_vmem and Np // tn == 1 and Np >= 2 * _LANE:
                tn = _pick_tile(Np, _LANE, Np // 2)
            return dict(fast=True, tm=Mp, tk=Kp, tn=tn)

    # ---- general tiled-K path ----------------------------------------------
    tm = _pick_tile(Mp, _SUBLANE, tm_cap)
    tk = _pick_tile(Kp, _LANE, tk_cap)
    tn = _pick_tile(Np, _LANE, tn_cap)
    while 8 * (tm * tk + tn * tk + tm * tn) > budget and tk > _LANE:
        tk = _pick_tile(Kp, _LANE, tk // 2)
    while 8 * (tm * tk + tn * tk + tm * tn) > budget and tn > _LANE:
        tn = _pick_tile(Np, _LANE, tn // 2)
    if not big_vmem and (Mp // tm) * (Np // tn) == 1 and Np >= 2 * _LANE:
        tn = _pick_tile(Np, _LANE, Np // 2)
    return dict(fast=False, tm=tm, tk=tk, tn=tn)


def _vmem_limit(footprint, vmem_cap):
    # Actual plan footprint with ~2x headroom; explicit raise above v5e's 16 MiB
    # default scoped limit, but never above what the generation physically has.
    return int(min(max(2 * footprint, 32 * _MIB), (vmem_cap * 9) // 10))


# ---------------------------------------------------------------------------
# Forward
# ---------------------------------------------------------------------------
_VMEM_CAP_CACHE = [None]


def _vmem_capacity():
    if _VMEM_CAP_CACHE[0] is None:
        cap = 64 * _MIB                              # conservative (v7x per-TC)
        try:
            info = pltpu.get_tpu_info()
            queried = int(getattr(info, "vmem_capacity_bytes", 0) or 0)
            if queried > 0:
                cap = queried
        except Exception:
            pass
        _VMEM_CAP_CACHE[0] = cap
    return _VMEM_CAP_CACHE[0]


@functools.partial(jax.jit, static_argnames=("vmem_cap",))
def _forward_impl(x, w, *, vmem_cap):
    B, I = x.shape
    O, _ = w.shape

    # Pad only to hardware granularity; zero-fill on K is required so padded
    # columns contribute nothing to the contraction.
    Mp = _round_up(B, _SUBLANE)
    Kp = _round_up(I, _LANE)
    Np = _round_up(O, _LANE)
    xp = x if (Mp == B and Kp == I) else jnp.pad(x, ((0, Mp - B), (0, Kp - I)))
    wp = w if (Np == O and Kp == I) else jnp.pad(w, ((0, Np - O), (0, Kp - I)))

    plan = _plan(Mp, Kp, Np, vmem_cap)
    tm, tk, tn = plan["tm"], plan["tk"], plan["tn"]

    if plan["fast"]:
        footprint = 4 * (2 * Mp * Kp + 2 * tn * Kp + 2 * Mp * tn)
        out_padded = pl.pallas_call(
            _matmul_kernel_resident_k,
            out_shape=jax.ShapeDtypeStruct((Mp, Np), x.dtype),
            grid_spec=pltpu.PrefetchScalarGridSpec(
                num_scalar_prefetch=0,
                grid=(Np // tn,),
                in_specs=[
                    pl.BlockSpec((Mp, Kp), lambda j: (0, 0)),
                    pl.BlockSpec((tn, Kp), lambda j: (j, 0)),
                ],
                out_specs=pl.BlockSpec((Mp, tn), lambda j: (0, j)),
            ),
            compiler_params=pltpu.CompilerParams(
                dimension_semantics=("parallel",),
                vmem_limit_bytes=_vmem_limit(footprint, vmem_cap),
            ),
        )(xp, wp)
    else:
        footprint = 8 * (tm * tk + tn * tk + tm * tn)
        out_padded = pl.pallas_call(
            _matmul_kernel_tiled_k,
            out_shape=jax.ShapeDtypeStruct((Mp, Np), x.dtype),
            grid_spec=pltpu.PrefetchScalarGridSpec(
                num_scalar_prefetch=0,
                grid=(Mp // tm, Np // tn, Kp // tk),
                in_specs=[
                    pl.BlockSpec((tm, tk), lambda i, j, k: (i, k)),
                    pl.BlockSpec((tn, tk), lambda i, j, k: (j, k)),
                ],
                out_specs=pl.BlockSpec((tm, tn), lambda i, j, k: (i, j)),
            ),
            compiler_params=pltpu.CompilerParams(
                dimension_semantics=("parallel", "parallel", "arbitrary"),
                vmem_limit_bytes=_vmem_limit(footprint, vmem_cap),
            ),
        )(xp, wp)

    if Mp == B and Np == O:
        return out_padded
    return out_padded[:B, :O]


def extreme_linear_forward(x, forward_weight, feedback_weight=None):
    """ExtremeLinear.forward: x @ forward_weight.T (feedback_weight unused)."""
    B, I = x.shape
    O, I2 = forward_weight.shape
    assert I == I2, "input_features mismatch"
    return _forward_impl(x, forward_weight, vmem_cap=_vmem_capacity())


# ---------------------------------------------------------------------------
# Test helpers / main
# ---------------------------------------------------------------------------
def kaiming_uniform(key, shape, a=math.sqrt(5), dtype=jnp.float32):
    # Matches torch.nn.init.kaiming_uniform_(w, a=sqrt(5)) for a 2-D weight:
    # fan_in = shape[1]; gain = sqrt(2/(1+a^2)); bound = gain*sqrt(3/fan_in).
    fan_in = shape[1]
    gain = math.sqrt(2.0 / (1.0 + a * a))
    bound = gain * math.sqrt(3.0 / fan_in)
    return jax.random.uniform(key, shape, dtype=dtype, minval=-bound, maxval=bound)


if __name__ == "__main__":
    key = jax.random.PRNGKey(0)
    k_x, k_fw, k_fb = jax.random.split(key, 3)

    batch, input_features, output_features = 8, 32, 64

    x = jax.random.normal(k_x, (batch, input_features), dtype=jnp.float32)
    forward_weight = kaiming_uniform(k_fw, (output_features, input_features))
    # feedback_weight exists as a parameter but is unused in the forward pass.
    feedback_weight = kaiming_uniform(k_fb, (output_features, input_features))

    out = jax.block_until_ready(
        extreme_linear_forward(x, forward_weight, feedback_weight)
    )
    ref = x @ forward_weight.T
    assert out.shape == (batch, output_features)
    assert jnp.allclose(out, ref, atol=1e-5, rtol=1e-5), "mismatch vs reference"

    # Larger shapes that exercise the full-K-resident fast path and padding.
    kx2, kw2 = jax.random.split(k_fb)
    x2 = jax.random.normal(kx2, (512, 1024), dtype=jnp.float32)
    w2 = kaiming_uniform(kw2, (768, 1024))
    out2 = jax.block_until_ready(extreme_linear_forward(x2, w2))
    ref2 = x2 @ w2.T
    assert jnp.allclose(out2, ref2, atol=2e-3, rtol=1e-3), "mismatch (fast path)"

    # A shape that forces the general tiled-K path (B > 512).
    kx3, kw3 = jax.random.split(kw2)
    x3 = jax.random.normal(kx3, (1024, 768), dtype=jnp.float32)
    w3 = kaiming_uniform(kw3, (512, 768))
    out3 = jax.block_until_ready(extreme_linear_forward(x3, w3))
    ref3 = x3 @ w3.T
    assert jnp.allclose(out3, ref3, atol=2e-3, rtol=1e-3), "mismatch (tiled path)"

    print("KERNEL_OK")
</pallas_src>

<mosaic_0001>
module attributes {stable_mosaic.version = 11 : i64} {
  func.func @_matmul_kernel_resident_k(%arg0: i32, %arg1: memref<8x128xf32, #tpu.memory_space<vmem>>, %arg2: memref<128x128xf32, #tpu.memory_space<vmem>>, %arg3: memref<8x128xf32, #tpu.memory_space<vmem>>) attributes {dimension_semantics = [#tpu.dimension_semantics<parallel>], iteration_bounds = array<i64: 1>, scalar_prefetch = 0 : i64, scratch_operands = 0 : i64, tpu.core_type = #tpu.core_type<tc>, window_params = [{pipeline_mode = #tpu.pipeline_mode<synchronous>, transform_indices = @transform_0, window_bounds = array<i64: 8, 128>}, {transform_indices = @transform_1, window_bounds = array<i64: 128, 128>}, {transform_indices = @transform_2, window_bounds = array<i64: 8, 128>}]} {
    %c0 = arith.constant 0 : index
    %c0_0 = arith.constant 0 : index
    %0 = vector.load %arg1[%c0, %c0_0] : memref<8x128xf32, #tpu.memory_space<vmem>>, vector<8x128xf32>
    %c0_1 = arith.constant 0 : index
    %c0_2 = arith.constant 0 : index
    %1 = vector.load %arg2[%c0_1, %c0_2] : memref<128x128xf32, #tpu.memory_space<vmem>>, vector<128x128xf32>
    %cst = arith.constant dense<0.000000e+00> : vector<8x128xf32>
    %2 = tpu.matmul %0, %1, %cst {dimension_numbers = #tpu.dot_dimension_numbers<[1], [1], [0], [0], [0, 0, 1, 0], [], []>} : vector<8x128xf32>, vector<128x128xf32>, vector<8x128xf32> -> vector<8x128xf32>
    %c0_3 = arith.constant 0 : index
    %c0_4 = arith.constant 0 : index
    %3 = vector.load %arg3[%c0_3, %c0_4] : memref<8x128xf32, #tpu.memory_space<vmem>>, vector<8x128xf32>
    tpu.vector_store %arg3[%c0_3, %c0_4], %2 {strides = array<i32>} : memref<8x128xf32, #tpu.memory_space<vmem>>, vector<8x128xf32>,
    return
  }
  func.func @transform_0(%arg0: i32) -> (i32, i32) {
    %c0_i32 = arith.constant 0 : i32
    %c0_i32_0 = arith.constant 0 : i32
    %c0_i32_1 = arith.constant 0 : i32
    return %c0_i32, %c0_i32_0 : i32, i32
  }
  func.func @transform_1(%arg0: i32) -> (i32, i32) {
    %c0_i32 = arith.constant 0 : i32
    %c0_i32_0 = arith.constant 0 : i32
    return %arg0, %c0_i32 : i32, i32
  }
  func.func @transform_2(%arg0: i32) -> (i32, i32) {
    %c0_i32 = arith.constant 0 : i32
    %c0_i32_0 = arith.constant 0 : i32
    return %c0_i32, %arg0 : i32, i32
  }
}

</mosaic_0001>

<llo_original>
// kernel: _forward_impl.1
$region0: #{_forward_impl.1}
  #allocation0 [shape = 'u32[]', space=smem, size = 0x4, offset = 0x4, fixed_abs, tag = 'smem constant byte address 0x4 - core index']
  #allocation1 [shape = 'u32[144,128]{1,0:T(1,128)}', space=vmem, size = 0x12000, scoped, tag = 'internal scratch']
  %s0 = inlined_call_operand.vmem [shape: f32[8,128], index: 0, kind: input, shape index: {}]
  %s1 = inlined_call_operand.vmem [shape: f32[128,128], index: 1, kind: input, shape index: {}]
  %s2 = inlined_call_operand.hbm [shape: f32[8,128], index: 2, kind: output, shape index: {}]
  %s3 = sld [smem:[#allocation0]]
  $region18: #{_forward_impl.1} parent=0
    _
  %s5 = ssub.s32 1, %s3
  %s6 = scalar_select 0, %s5, %s3
  $region1: #{_forward_impl.1} parent=0
    #allocation2 [shape = 'u8[4096]{0}', space=vmem, size = 0x1000, scoped, tag = 'output window, operand 0, single buffered']
    #allocation3 [shape = 's32[1]{0}', space=sflag, size = 0x4, scoped, tag = 'scoped memory for _forward_impl.1']
    %7 = vsyncpa [#allocation3], 0
    // Predicated region
    $region2: #{_forward_impl.1} parent=1 // pred_check
      _
    $region3: #{_forward_impl.1} parent=1 // pred_check_branch
      %9 = sbr.rel (0) target = $region5
    $region4: #{_forward_impl.1} parent=1 // pred_region
      _
    $region5: #{_forward_impl.1} parent=1 // pred_fallthru
      _
    // Predicated region
    $region6: #{_forward_impl.1} parent=1 // pred_check
      _
    $region7: #{_forward_impl.1} parent=1 // pred_check_branch
      %11 = sbr.rel (0) target = $region9
    $region8: #{_forward_impl.1} parent=1 // pred_region
      _
    $region9: #{_forward_impl.1} parent=1 // pred_fallthru
      _
    %v12 = vld [vmem:[%s0] sm:$0xff]
    %v13 = vld [vmem:[%s1] sm:$0xff]
    %v14 = vld [vmem:[%s1 + $0x8] sm:$0xff]
    %v15 = vld [vmem:[%s1 + $0x10] sm:$0xff]
    %v16 = vld [vmem:[%s1 + $0x18] sm:$0xff]
    %v17 = vld [vmem:[%s1 + $0x20] sm:$0xff]
    %v18 = vld [vmem:[%s1 + $0x28] sm:$0xff]
    %v19 = vld [vmem:[%s1 + $0x30] sm:$0xff]
    %v20 = vld [vmem:[%s1 + $0x38] sm:$0xff]
    %v21 = vld [vmem:[%s1 + $0x40] sm:$0xff]
    %v22 = vld [vmem:[%s1 + $0x48] sm:$0xff]
    %v23 = vld [vmem:[%s1 + $0x50] sm:$0xff]
    %v24 = vld [vmem:[%s1 + $0x58] sm:$0xff]
    %v25 = vld [vmem:[%s1 + $0x60] sm:$0xff]
    %v26 = vld [vmem:[%s1 + $0x68] sm:$0xff]
    %v27 = vld [vmem:[%s1 + $0x70] sm:$0xff]
    %v28 = vld [vmem:[%s1 + $0x78] sm:$0xff]
    %29 = vmatprep.subr.mxu0 0.0
    %30 = vmatpush1.xpose.msra.mxu0 %v13
    %31 = vmatprep.subr.mxu0 0.0
    %32 = vmatpush1.xpose.msra.mxu0 %v14
    %33 = vmatprep.subr.mxu0 0.0
    %34 = vmatpush1.xpose.msra.mxu0 %v15
    %35 = vmatprep.subr.mxu0 0.0
    %36 = vmatpush1.xpose.msra.mxu0 %v16
    %37 = vmatprep.subr.mxu0 0.0
    %38 = vmatpush1.xpose.msra.mxu0 %v17
    %39 = vmatprep.subr.mxu0 0.0
    %40 = vmatpush1.xpose.msra.mxu0 %v18
    %41 = vmatprep.subr.mxu0 0.0
    %42 = vmatpush1.xpose.msra.mxu0 %v19
    %43 = vmatprep.subr.mxu0 0.0
    %44 = vmatpush1.xpose.msra.mxu0 %v20
    %45 = vmatprep.subr.mxu0 0.0
    %46 = vmatpush1.xpose.msra.mxu0 %v21
    %47 = vmatprep.subr.mxu0 0.0
    %48 = vmatpush1.xpose.msra.mxu0 %v22
    %49 = vmatprep.subr.mxu0 0.0
    %50 = vmatpush1.xpose.msra.mxu0 %v23
    %51 = vmatprep.subr.mxu0 0.0
    %52 = vmatpush1.xpose.msra.mxu0 %v24
    %53 = vmatprep.subr.mxu0 0.0
    %54 = vmatpush1.xpose.msra.mxu0 %v25
    %55 = vmatprep.subr.mxu0 0.0
    %56 = vmatpush1.xpose.msra.mxu0 %v26
    %57 = vmatprep.subr.mxu0 0.0
    %58 = vmatpush1.xpose.msra.mxu0 %v27
    %59 = vmatprep.subr.mxu0 0.0
    %60 = vmatpush1.xpose.msra.mxu0 %v28
    %61 = vmatprep.subr.mxu0 0.0
    %62 = vmatpush1.xpose.msra.mxu0 0.0
    %63 = vmatprep.subr.mxu0 0.0
    %64 = vmatpush1.xpose.msra.mxu0 0.0
    %65 = vmatprep.subr.mxu0 0.0
    %66 = vmatpush1.xpose.msra.mxu0 0.0
    %67 = vmatprep.subr.mxu0 0.0
    %68 = vmatpush1.xpose.msra.mxu0 0.0
    %69 = vmatprep.subr.mxu0 0.0
    %70 = vmatpush1.xpose.msra.mxu0 0.0
    %71 = vmatprep.subr.mxu0 0.0
    %72 = vmatpush1.xpose.msra.mxu0 0.0
    %73 = vmatprep.subr.mxu0 0.0
    %74 = vmatpush1.xpose.msra.mxu0 0.0
    %75 = vmatprep.subr.mxu0 0.0
    %76 = vmatpush1.xpose.msra.mxu0 0.0
    %77 = vmatprep.subr.mxu0 0.0
    %78 = vmatpush1.xpose.msra.mxu0 0.0
    %79 = vmatprep.subr.mxu0 0.0
    %80 = vmatpush1.xpose.msra.mxu0 0.0
    %81 = vmatprep.subr.mxu0 0.0
    %82 = vmatpush1.xpose.msra.mxu0 0.0
    %83 = vmatprep.subr.mxu0 0.0
    %84 = vmatpush1.xpose.msra.mxu0 0.0
    %85 = vmatprep.subr.mxu0 0.0
    %86 = vmatpush1.xpose.msra.mxu0 0.0
    %87 = vmatprep.subr.mxu0 0.0
    %88 = vmatpush1.xpose.msra.mxu0 0.0
    %89 = vmatprep.subr.mxu0 0.0
    %90 = vmatpush1.xpose.msra.mxu0 0.0
    %91 = vmatprep.subr.mxu0 0.0
    %92 = vmatpush1.xpose.msra.mxu0 0.0
    %93 = vmatprep.mubr.f32.mxu0 0.0
    %94 = vmatmul.mubr.f32.gmra.mrb[0].mxu0 %v12
    %v95 = vpop.f32.mrb[0].mxu0
    %v96 = vadd.f32 0.0, %v95
    %v97 = vpop.f32.mrb[0].mxu0
    %98 = vdwg.mxu0
    %99 = vst [vmem:[#allocation2] sm:$0xff] %v96
    // Predicated region
    $region10: #{_forward_impl.1} parent=1 // pred_check
      _
    $region11: #{_forward_impl.1} parent=1 // pred_check_branch
      %101 = sbr.rel (0) target = $region13
    $region12: #{_forward_impl.1} parent=1 // pred_region
      %s103 = ssub.s32 128, 128
      %104 = vsyncadd [#allocation3], %s103
      %s106 = sshll.u32 [#allocation2], 4
      %s107 = int_to_ptr.vmem [resolvable:$true] %s106
      %109 = dma.vmem_to_hbm [thread:$0]  %s107, 128, %s2, [#allocation3]
    $region13: #{_forward_impl.1} parent=1 // pred_fallthru
      _
    // Predicated region
    $region14: #{_forward_impl.1} parent=1 // pred_check
      _
    $region15: #{_forward_impl.1} parent=1 // pred_check_branch
      %111 = sbr.rel (0) target = $region17
    $region16: #{_forward_impl.1} parent=1 // pred_region
      %112 = dma.done [#allocation3], 128
    $region17: #{_forward_impl.1} parent=1 // pred_fallthru
      _
    %113 = vsyncpa [#allocation3], 1

</llo_original>
